<compile_context>
chip_gen: v7x
topology: tpu7x:2x2x1
jax: 0.10.0
libtpu: 0.0.40
codegen_flags: <defaults>
</compile_context>

<pallas_src>
import math

import jax
import jax.numpy as jnp
from jax.experimental import pallas as pl
from jax.experimental.pallas import tpu as pltpu

LN_EPS = 1e-5


def _gelu_exact(x):
    # PyTorch nn.GELU() default (approximate='none'): 0.5*x*(1+erf(x/sqrt(2)))
    return 0.5 * x * (1.0 + jax.lax.erf(x * (1.0 / math.sqrt(2.0))))


def _layernorm_rows(x, gamma, beta):
    # x: (R, C); normalize over channels (last axis), biased variance.
    # Two-pass form (stable; matches nn.LayerNorm).
    mean = jnp.mean(x, axis=-1, keepdims=True)
    d = x - mean
    var = jnp.mean(d * d, axis=-1, keepdims=True)
    return d * jax.lax.rsqrt(var + LN_EPS) * gamma + beta


def mixer_layer_kernel(
    x_ref,              # (Bn*P, C)  rows layout: row n*P+p, col c = x[n, p, c]
    g1_ref, b1n_ref,    # (1, C)   layernorm1 weight / bias
    g2_ref, b2n_ref,    # (1, C)   layernorm2 weight / bias
    w1t_ref, b1t_ref,   # (P, Hp), (1, Hp)  token-mix linear1 (pre-transposed)
    w2t_ref, b2t_ref,   # (Hp, P), (1, P)   token-mix linear2 (pre-transposed)
    w1c_ref, b1c_ref,   # (C, Hc), (1, Hc)  channel-mix linear1 (pre-transposed)
    w2c_ref, b2c_ref,   # (Hc, C), (1, C)   channel-mix linear2 (pre-transposed)
    o_ref,              # (Bn*P, C)
):
    BnP, C = x_ref.shape
    P = w1t_ref.shape[0]
    Bn = BnP // P

    xs = x_ref[...].astype(jnp.float32)                        # (Bn*P, C)

    # ---- token (patch) mixing ------------------------------------------
    y = _layernorm_rows(xs, g1_ref[...], b1n_ref[...])          # (Bn*P, C)
    # rows -> per-sample transposed view (Bn*C, P): one batched minor-dim
    # swap; the leading-dim reshapes are layout-free (P, C multiples of 8).
    y_t = jnp.swapaxes(y.reshape(Bn, P, C), 1, 2).reshape(Bn * C, P)
    t = jnp.dot(y_t, w1t_ref[...], preferred_element_type=jnp.float32) + b1t_ref[...]
    t = _gelu_exact(t)                                           # (Bn*C, Hp)
    z = jnp.dot(t, w2t_ref[...], preferred_element_type=jnp.float32) + b2t_ref[...]
    # back to rows layout + residual
    y_tok = jnp.swapaxes(z.reshape(Bn, C, P), 1, 2).reshape(Bn * P, C)
    xs = xs + y_tok                                              # (Bn*P, C)

    # ---- channel mixing (rows layout throughout; no relayout) -----------
    w = _layernorm_rows(xs, g2_ref[...], b2n_ref[...])           # (Bn*P, C)
    h = jnp.dot(w, w1c_ref[...], preferred_element_type=jnp.float32) + b1c_ref[...]
    h = _gelu_exact(h)                                           # (Bn*P, Hc)
    y_ch = jnp.dot(h, w2c_ref[...], preferred_element_type=jnp.float32) + b2c_ref[...]

    o_ref[...] = (xs + y_ch).astype(o_ref.dtype)


def _vmem_limits():
    """Per-generation VMEM capacity -> (vmem_limit_bytes, activation budget)."""
    try:
        cap = int(pltpu.get_tpu_info().vmem_capacity_bytes)
    except Exception:
        cap = 64 * 1024 * 1024            # conservative fallback (v7x per-core)
    vmem_limit = int(cap * 0.80)          # ~51 MiB on v7x, ~102 MiB on v5e/v6e
    act_budget = int(cap * 0.45)          # headroom for weights/compiler scratch
    return vmem_limit, act_budget


def _pick_bn(n_samples, P, C, Hp, Hc, act_budget_bytes):
    """Choose the per-grid-step sample block from the VMEM budget."""
    lane = 128
    pad = lambda d: -(-d // lane) * lane          # lane padding of narrow dims
    per_sample = 4 * (
        2 * 2 * P * pad(C)        # in + out activation blocks (double-buffered)
        + 2 * P * pad(C)          # f32 copy + layernorm temporaries
        + 2 * C * pad(P)          # token-layout activations (pre/post MLP)
        + C * pad(Hp)             # token-MLP hidden
        + P * pad(Hc)             # channel-MLP hidden
    )
    bn = max(1, act_budget_bytes // per_sample)
    # keep >= 2 grid steps whenever possible so both v7x TensorCores get work
    bn = min(bn, max(1, pl.cdiv(n_samples, 2)))
    # keep the (bn*P, C) block second-to-last dim a multiple of 8
    align = 8 // math.gcd(P, 8)
    bn = -(-bn // align) * align
    return int(bn)


@jax.jit
def mixer_layer(x, params):
    """x: (N, P, C) float32.  params: dict of weights (see init_params)."""
    N, P, C = x.shape
    Hp = params["w1_tok_t"].shape[1]
    Hc = params["w1_ch_t"].shape[1]

    vmem_limit, act_budget = _vmem_limits()
    Bn = _pick_bn(N, P, C, Hp, Hc, act_budget)
    n_blocks = pl.cdiv(N, Bn)
    Npad = n_blocks * Bn

    xp = x if Npad == N else jnp.pad(x, ((0, Npad - N), (0, 0), (0, 0)))
    # Free leading-dim reshape to the rows layout; NO host transpose.
    x_rows = xp.reshape(Npad * P, C)

    param_order = ("ln1_g", "ln1_b", "ln2_g", "ln2_b",
                   "w1_tok_t", "b1_tok", "w2_tok_t", "b2_tok",
                   "w1_ch_t", "b1_ch", "w2_ch_t", "b2_ch")
    full_spec = lambda a: pl.BlockSpec(a.shape, lambda n: (0, 0))

    out_rows = pl.pallas_call(
        mixer_layer_kernel,
        out_shape=jax.ShapeDtypeStruct((Npad * P, C), x.dtype),
        grid_spec=pltpu.PrefetchScalarGridSpec(
            num_scalar_prefetch=0,
            grid=(n_blocks,),
            in_specs=[pl.BlockSpec((Bn * P, C), lambda n: (n, 0))] +
                     [full_spec(params[k]) for k in param_order],
            out_specs=pl.BlockSpec((Bn * P, C), lambda n: (n, 0)),
        ),
        compiler_params=pltpu.CompilerParams(
            dimension_semantics=("parallel",),        # megacore-shardable axis
            vmem_limit_bytes=vmem_limit,              # per-generation budget
        ),
    )(x_rows, *[params[k] for k in param_order])

    return out_rows.reshape(Npad, P, C)[:N]


def init_params(key, patch_number, patch_mlp_dim, channel_dim, channel_mlp_dim):
    """Deterministic synthetic initialization matching the PyTorch shapes."""
    ks = jax.random.split(key, 8)

    def lin(kw, kb, out_dim, in_dim):
        bound = 1.0 / math.sqrt(in_dim)
        w = jax.random.uniform(kw, (out_dim, in_dim), jnp.float32, -bound, bound)
        b = jax.random.uniform(kb, (out_dim,), jnp.float32, -bound, bound)
        return w, b

    w1_tok, b1_tok = lin(ks[0], ks[1], patch_mlp_dim, patch_number)   # Linear(P, Hp)
    w2_tok, b2_tok = lin(ks[2], ks[3], patch_number, patch_mlp_dim)   # Linear(Hp, P)
    w1_ch,  b1_ch  = lin(ks[4], ks[5], channel_mlp_dim, channel_dim)  # Linear(C, Hc)
    w2_ch,  b2_ch  = lin(ks[6], ks[7], channel_dim, channel_mlp_dim)  # Linear(Hc, C)

    return {
        "ln1_g": jnp.ones((1, channel_dim), jnp.float32),
        "ln1_b": jnp.zeros((1, channel_dim), jnp.float32),
        "ln2_g": jnp.ones((1, channel_dim), jnp.float32),
        "ln2_b": jnp.zeros((1, channel_dim), jnp.float32),
        # All linear weights pre-transposed ONCE on the host so each in-kernel
        # matmul is a plain `act @ W_t` MXU feed (no per-grid-step .T relayout).
        "w1_tok_t": w1_tok.T, "b1_tok": b1_tok.reshape(1, patch_mlp_dim),
        "w2_tok_t": w2_tok.T, "b2_tok": b2_tok.reshape(1, patch_number),
        "w1_ch_t":  w1_ch.T,  "b1_ch":  b1_ch.reshape(1, channel_mlp_dim),
        "w2_ch_t":  w2_ch.T,  "b2_ch":  b2_ch.reshape(1, channel_dim),
    }


def mixer_layer_ref(x, p):
    """Pure-JAX reference mirroring the PyTorch forward pass."""
    def ln(v, g, b):
        m = jnp.mean(v, axis=-1, keepdims=True)
        var = jnp.mean(jnp.square(v - m), axis=-1, keepdims=True)
        return (v - m) * jax.lax.rsqrt(var + LN_EPS) * g + b

    y = ln(x, p["ln1_g"], p["ln1_b"])
    y = jnp.swapaxes(y, 1, 2)                       # (N, C, P)
    y = _gelu_exact(y @ p["w1_tok_t"] + p["b1_tok"])
    y = y @ p["w2_tok_t"] + p["b2_tok"]
    y = jnp.swapaxes(y, 1, 2)                       # (N, P, C)
    x = x + y
    y = ln(x, p["ln2_g"], p["ln2_b"])
    y = _gelu_exact(y @ p["w1_ch_t"] + p["b1_ch"])
    y = y @ p["w2_ch_t"] + p["b2_ch"]
    return x + y


if __name__ == "__main__":
    n_samples = 2
    patch_number = 16       # P
    channel_dim = 32        # C
    patch_mlp_dim = 64      # Hp
    channel_mlp_dim = 64    # Hc

    key = jax.random.PRNGKey(0)
    kx, kp = jax.random.split(key)
    x = jax.random.normal(kx, (n_samples, patch_number, channel_dim), jnp.float32)
    params = init_params(kp, patch_number, patch_mlp_dim, channel_dim, channel_mlp_dim)

    out = jax.block_until_ready(mixer_layer(x, params))
    ref = jax.block_until_ready(mixer_layer_ref(x, params))

    assert out.shape == (n_samples, patch_number, channel_dim)
    assert jnp.allclose(out, ref, atol=1e-4, rtol=1e-4), "mismatch vs JAX reference"

    print("KERNEL_OK")
</pallas_src>

<mosaic_0001>
module attributes {stable_mosaic.version = 11 : i64} {
  func.func @mixer_layer_kernel(%arg0: i32, %arg1: memref<16x32xf32, #tpu.memory_space<vmem>>, %arg2: memref<1x32xf32, #tpu.memory_space<vmem>>, %arg3: memref<1x32xf32, #tpu.memory_space<vmem>>, %arg4: memref<1x32xf32, #tpu.memory_space<vmem>>, %arg5: memref<1x32xf32, #tpu.memory_space<vmem>>, %arg6: memref<16x64xf32, #tpu.memory_space<vmem>>, %arg7: memref<1x64xf32, #tpu.memory_space<vmem>>, %arg8: memref<64x16xf32, #tpu.memory_space<vmem>>, %arg9: memref<1x16xf32, #tpu.memory_space<vmem>>, %arg10: memref<32x64xf32, #tpu.memory_space<vmem>>, %arg11: memref<1x64xf32, #tpu.memory_space<vmem>>, %arg12: memref<64x32xf32, #tpu.memory_space<vmem>>, %arg13: memref<1x32xf32, #tpu.memory_space<vmem>>, %arg14: memref<16x32xf32, #tpu.memory_space<vmem>>) attributes {dimension_semantics = [#tpu.dimension_semantics<parallel>], iteration_bounds = array<i64: 2>, scalar_prefetch = 0 : i64, scratch_operands = 0 : i64, tpu.core_type = #tpu.core_type<tc>, window_params = [{transform_indices = @transform_0, window_bounds = array<i64: 16, 32>}, {pipeline_mode = #tpu.pipeline_mode<synchronous>, transform_indices = @transform_1, window_bounds = array<i64: 1, 32>}, {pipeline_mode = #tpu.pipeline_mode<synchronous>, transform_indices = @transform_2, window_bounds = array<i64: 1, 32>}, {pipeline_mode = #tpu.pipeline_mode<synchronous>, transform_indices = @transform_3, window_bounds = array<i64: 1, 32>}, {pipeline_mode = #tpu.pipeline_mode<synchronous>, transform_indices = @transform_4, window_bounds = array<i64: 1, 32>}, {pipeline_mode = #tpu.pipeline_mode<synchronous>, transform_indices = @transform_5, window_bounds = array<i64: 16, 64>}, {pipeline_mode = #tpu.pipeline_mode<synchronous>, transform_indices = @transform_6, window_bounds = array<i64: 1, 64>}, {pipeline_mode = #tpu.pipeline_mode<synchronous>, transform_indices = @transform_7, window_bounds = array<i64: 64, 16>}, {pipeline_mode = #tpu.pipeline_mode<synchronous>, transform_indices = @transform_8, window_bounds = array<i64: 1, 16>}, {pipeline_mode = #tpu.pipeline_mode<synchronous>, transform_indices = @transform_9, window_bounds = array<i64: 32, 64>}, {pipeline_mode = #tpu.pipeline_mode<synchronous>, transform_indices = @transform_10, window_bounds = array<i64: 1, 64>}, {pipeline_mode = #tpu.pipeline_mode<synchronous>, transform_indices = @transform_11, window_bounds = array<i64: 64, 32>}, {pipeline_mode = #tpu.pipeline_mode<synchronous>, transform_indices = @transform_12, window_bounds = array<i64: 1, 32>}, {transform_indices = @transform_13, window_bounds = array<i64: 16, 32>}]} {
    %c0 = arith.constant 0 : index
    %c0_0 = arith.constant 0 : index
    %0 = vector.load %arg1[%c0, %c0_0] : memref<16x32xf32, #tpu.memory_space<vmem>>, vector<16x32xf32>
    %c0_1 = arith.constant 0 : index
    %c0_2 = arith.constant 0 : index
    %1 = vector.load %arg2[%c0_1, %c0_2] : memref<1x32xf32, #tpu.memory_space<vmem>>, vector<1x32xf32>
    %c0_3 = arith.constant 0 : index
    %c0_4 = arith.constant 0 : index
    %2 = vector.load %arg3[%c0_3, %c0_4] : memref<1x32xf32, #tpu.memory_space<vmem>>, vector<1x32xf32>
    %cst = arith.constant dense<0.000000e+00> : vector<16xf32>
    %3 = vector.multi_reduction <add>, %0, %cst [1] : vector<16x32xf32> to vector<16xf32>
    %4 = vector.shape_cast %3 : vector<16xf32> to vector<16x1xf32>
    %cst_5 = arith.constant 3.200000e+01 : f32
    %5 = vector.broadcast %cst_5 : f32 to vector<16x1xf32>
    %6 = arith.divf %4, %5 : vector<16x1xf32>
    %7 = vector.broadcast %6 : vector<16x1xf32> to vector<16x32xf32>
    %8 = arith.subf %0, %7 : vector<16x32xf32>
    %9 = arith.mulf %8, %8 : vector<16x32xf32>
    %cst_6 = arith.constant dense<0.000000e+00> : vector<16xf32>
    %10 = vector.multi_reduction <add>, %9, %cst_6 [1] : vector<16x32xf32> to vector<16xf32>
    %11 = vector.shape_cast %10 : vector<16xf32> to vector<16x1xf32>
    %cst_7 = arith.constant 3.200000e+01 : f32
    %12 = vector.broadcast %cst_7 : f32 to vector<16x1xf32>
    %13 = arith.divf %11, %12 : vector<16x1xf32>
    %cst_8 = arith.constant 9.99999974E-6 : f32
    %14 = vector.broadcast %cst_8 : f32 to vector<16x1xf32>
    %15 = arith.addf %13, %14 : vector<16x1xf32>
    %16 = math.rsqrt %15 : vector<16x1xf32>
    %17 = vector.broadcast %16 : vector<16x1xf32> to vector<16x32xf32>
    %18 = arith.mulf %8, %17 : vector<16x32xf32>
    %19 = vector.broadcast %1 : vector<1x32xf32> to vector<16x32xf32>
    %20 = arith.mulf %18, %19 : vector<16x32xf32>
    %21 = vector.broadcast %2 : vector<1x32xf32> to vector<16x32xf32>
    %22 = arith.addf %20, %21 : vector<16x32xf32>
    %23 = vector.shape_cast %22 : vector<16x32xf32> to vector<1x16x32xf32>
    %24 = tpu.transpose %23, [0, 2, 1] : vector<1x16x32xf32> -> vector<1x32x16xf32>
    %25 = vector.shape_cast %24 : vector<1x32x16xf32> to vector<32x16xf32>
    %c0_9 = arith.constant 0 : index
    %c0_10 = arith.constant 0 : index
    %26 = vector.load %arg6[%c0_9, %c0_10] : memref<16x64xf32, #tpu.memory_space<vmem>>, vector<16x64xf32>
    %cst_11 = arith.constant dense<0.000000e+00> : vector<32x64xf32>
    %27 = tpu.matmul %25, %26, %cst_11 {dimension_numbers = #tpu.dot_dimension_numbers<[1], [0], [0], [1], [0, 0, 1, 1], [], []>} : vector<32x16xf32>, vector<16x64xf32>, vector<32x64xf32> -> vector<32x64xf32>
    %c0_12 = arith.constant 0 : index
    %c0_13 = arith.constant 0 : index
    %28 = vector.load %arg7[%c0_12, %c0_13] : memref<1x64xf32, #tpu.memory_space<vmem>>, vector<1x64xf32>
    %29 = vector.broadcast %28 : vector<1x64xf32> to vector<32x64xf32>
    %30 = arith.addf %27, %29 : vector<32x64xf32>
    %cst_14 = arith.constant 5.000000e-01 : f32
    %31 = vector.broadcast %cst_14 : f32 to vector<32x64xf32>
    %32 = arith.mulf %31, %30 : vector<32x64xf32>
    %cst_15 = arith.constant 0.707106769 : f32
    %33 = vector.broadcast %cst_15 : f32 to vector<32x64xf32>
    %34 = arith.mulf %30, %33 : vector<32x64xf32>
    %35 = math.erf %34 : vector<32x64xf32>
    %cst_16 = arith.constant 1.000000e+00 : f32
    %36 = vector.broadcast %cst_16 : f32 to vector<32x64xf32>
    %37 = arith.addf %36, %35 : vector<32x64xf32>
    %38 = arith.mulf %32, %37 : vector<32x64xf32>
    %c0_17 = arith.constant 0 : index
    %c0_18 = arith.constant 0 : index
    %39 = vector.load %arg8[%c0_17, %c0_18] : memref<64x16xf32, #tpu.memory_space<vmem>>, vector<64x16xf32>
    %cst_19 = arith.constant dense<0.000000e+00> : vector<32x16xf32>
    %40 = tpu.matmul %38, %39, %cst_19 {dimension_numbers = #tpu.dot_dimension_numbers<[1], [0], [0], [1], [0, 0, 1, 1], [], []>} : vector<32x64xf32>, vector<64x16xf32>, vector<32x16xf32> -> vector<32x16xf32>
    %c0_20 = arith.constant 0 : index
    %c0_21 = arith.constant 0 : index
    %41 = vector.load %arg9[%c0_20, %c0_21] : memref<1x16xf32, #tpu.memory_space<vmem>>, vector<1x16xf32>
    %42 = vector.broadcast %41 : vector<1x16xf32> to vector<32x16xf32>
    %43 = arith.addf %40, %42 : vector<32x16xf32>
    %44 = vector.shape_cast %43 : vector<32x16xf32> to vector<1x32x16xf32>
    %45 = tpu.transpose %44, [0, 2, 1] : vector<1x32x16xf32> -> vector<1x16x32xf32>
    %46 = vector.shape_cast %45 : vector<1x16x32xf32> to vector<16x32xf32>
    %47 = arith.addf %0, %46 : vector<16x32xf32>
    %c0_22 = arith.constant 0 : index
    %c0_23 = arith.constant 0 : index
    %48 = vector.load %arg4[%c0_22, %c0_23] : memref<1x32xf32, #tpu.memory_space<vmem>>, vector<1x32xf32>
    %c0_24 = arith.constant 0 : index
    %c0_25 = arith.constant 0 : index
    %49 = vector.load %arg5[%c0_24, %c0_25] : memref<1x32xf32, #tpu.memory_space<vmem>>, vector<1x32xf32>
    %cst_26 = arith.constant dense<0.000000e+00> : vector<16xf32>
    %50 = vector.multi_reduction <add>, %47, %cst_26 [1] : vector<16x32xf32> to vector<16xf32>
    %51 = vector.shape_cast %50 : vector<16xf32> to vector<16x1xf32>
    %cst_27 = arith.constant 3.200000e+01 : f32
    %52 = vector.broadcast %cst_27 : f32 to vector<16x1xf32>
    %53 = arith.divf %51, %52 : vector<16x1xf32>
    %54 = vector.broadcast %53 : vector<16x1xf32> to vector<16x32xf32>
    %55 = arith.subf %47, %54 : vector<16x32xf32>
    %56 = arith.mulf %55, %55 : vector<16x32xf32>
    %cst_28 = arith.constant dense<0.000000e+00> : vector<16xf32>
    %57 = vector.multi_reduction <add>, %56, %cst_28 [1] : vector<16x32xf32> to vector<16xf32>
    %58 = vector.shape_cast %57 : vector<16xf32> to vector<16x1xf32>
    %cst_29 = arith.constant 3.200000e+01 : f32
    %59 = vector.broadcast %cst_29 : f32 to vector<16x1xf32>
    %60 = arith.divf %58, %59 : vector<16x1xf32>
    %cst_30 = arith.constant 9.99999974E-6 : f32
    %61 = vector.broadcast %cst_30 : f32 to vector<16x1xf32>
    %62 = arith.addf %60, %61 : vector<16x1xf32>
    %63 = math.rsqrt %62 : vector<16x1xf32>
    %64 = vector.broadcast %63 : vector<16x1xf32> to vector<16x32xf32>
    %65 = arith.mulf %55, %64 : vector<16x32xf32>
    %66 = vector.broadcast %48 : vector<1x32xf32> to vector<16x32xf32>
    %67 = arith.mulf %65, %66 : vector<16x32xf32>
    %68 = vector.broadcast %49 : vector<1x32xf32> to vector<16x32xf32>
    %69 = arith.addf %67, %68 : vector<16x32xf32>
    %c0_31 = arith.constant 0 : index
    %c0_32 = arith.constant 0 : index
    %70 = vector.load %arg10[%c0_31, %c0_32] : memref<32x64xf32, #tpu.memory_space<vmem>>, vector<32x64xf32>
    %cst_33 = arith.constant dense<0.000000e+00> : vector<16x64xf32>
    %71 = tpu.matmul %69, %70, %cst_33 {dimension_numbers = #tpu.dot_dimension_numbers<[1], [0], [0], [1], [0, 0, 1, 1], [], []>} : vector<16x32xf32>, vector<32x64xf32>, vector<16x64xf32> -> vector<16x64xf32>
    %c0_34 = arith.constant 0 : index
    %c0_35 = arith.constant 0 : index
    %72 = vector.load %arg11[%c0_34, %c0_35] : memref<1x64xf32, #tpu.memory_space<vmem>>, vector<1x64xf32>
    %73 = vector.broadcast %72 : vector<1x64xf32> to vector<16x64xf32>
    %74 = arith.addf %71, %73 : vector<16x64xf32>
    %cst_36 = arith.constant 5.000000e-01 : f32
    %75 = vector.broadcast %cst_36 : f32 to vector<16x64xf32>
    %76 = arith.mulf %75, %74 : vector<16x64xf32>
    %cst_37 = arith.constant 0.707106769 : f32
    %77 = vector.broadcast %cst_37 : f32 to vector<16x64xf32>
    %78 = arith.mulf %74, %77 : vector<16x64xf32>
    %79 = math.erf %78 : vector<16x64xf32>
    %cst_38 = arith.constant 1.000000e+00 : f32
    %80 = vector.broadcast %cst_38 : f32 to vector<16x64xf32>
    %81 = arith.addf %80, %79 : vector<16x64xf32>
    %82 = arith.mulf %76, %81 : vector<16x64xf32>
    %c0_39 = arith.constant 0 : index
    %c0_40 = arith.constant 0 : index
    %83 = vector.load %arg12[%c0_39, %c0_40] : memref<64x32xf32, #tpu.memory_space<vmem>>, vector<64x32xf32>
    %cst_41 = arith.constant dense<0.000000e+00> : vector<16x32xf32>
    %84 = tpu.matmul %82, %83, %cst_41 {dimension_numbers = #tpu.dot_dimension_numbers<[1], [0], [0], [1], [0, 0, 1, 1], [], []>} : vector<16x64xf32>, vector<64x32xf32>, vector<16x32xf32> -> vector<16x32xf32>
    %c0_42 = arith.constant 0 : index
    %c0_43 = arith.constant 0 : index
    %85 = vector.load %arg13[%c0_42, %c0_43] : memref<1x32xf32, #tpu.memory_space<vmem>>, vector<1x32xf32>
    %86 = vector.broadcast %85 : vector<1x32xf32> to vector<16x32xf32>
    %87 = arith.addf %84, %86 : vector<16x32xf32>
    %88 = arith.addf %47, %87 : vector<16x32xf32>
    %c0_44 = arith.constant 0 : index
    %c0_45 = arith.constant 0 : index
    %89 = vector.load %arg14[%c0_44, %c0_45] : memref<16x32xf32, #tpu.memory_space<vmem>>, vector<16x32xf32>
    tpu.vector_store %arg14[%c0_44, %c0_45], %88 {strides = array<i32>} : memref<16x32xf32, #tpu.memory_space<vmem>>, vector<16x32xf32>,
    return
  }
  func.func @transform_0(%arg0: i32) -> (i32, i32) {
    %c0_i32 = arith.constant 0 : i32
    %c0_i32_0 = arith.constant 0 : i32
    return %arg0, %c0_i32 : i32, i32
  }
  func.func @transform_1(%arg0: i32) -> (i32, i32) {
    %c0_i32 = arith.constant 0 : i32
    %c0_i32_0 = arith.constant 0 : i32
    %c0_i32_1 = arith.constant 0 : i32
    return %c0_i32, %c0_i32_0 : i32, i32
  }
  func.func @transform_2(%arg0: i32) -> (i32, i32) {
    %c0_i32 = arith.constant 0 : i32
    %c0_i32_0 = arith.constant 0 : i32
    %c0_i32_1 = arith.constant 0 : i32
    return %c0_i32, %c0_i32_0 : i32, i32
  }
  func.func @transform_3(%arg0: i32) -> (i32, i32) {
    %c0_i32 = arith.constant 0 : i32
    %c0_i32_0 = arith.constant 0 : i32
    %c0_i32_1 = arith.constant 0 : i32
    return %c0_i32, %c0_i32_0 : i32, i32
  }
  func.func @transform_4(%arg0: i32) -> (i32, i32) {
    %c0_i32 = arith.constant 0 : i32
    %c0_i32_0 = arith.constant 0 : i32
    %c0_i32_1 = arith.constant 0 : i32
    return %c0_i32, %c0_i32_0 : i32, i32
  }
  func.func @transform_5(%arg0: i32) -> (i32, i32) {
    %c0_i32 = arith.constant 0 : i32
    %c0_i32_0 = arith.constant 0 : i32
    %c0_i32_1 = arith.constant 0 : i32
    return %c0_i32, %c0_i32_0 : i32, i32
  }
  func.func @transform_6(%arg0: i32) -> (i32, i32) {
    %c0_i32 = arith.constant 0 : i32
    %c0_i32_0 = arith.constant 0 : i32
    %c0_i32_1 = arith.constant 0 : i32
    return %c0_i32, %c0_i32_0 : i32, i32
  }
  func.func @transform_7(%arg0: i32) -> (i32, i32) {
    %c0_i32 = arith.constant 0 : i32
    %c0_i32_0 = arith.constant 0 : i32
    %c0_i32_1 = arith.constant 0 : i32
    return %c0_i32, %c0_i32_0 : i32, i32
  }
  func.func @transform_8(%arg0: i32) -> (i32, i32) {
    %c0_i32 = arith.constant 0 : i32
    %c0_i32_0 = arith.constant 0 : i32
    %c0_i32_1 = arith.constant 0 : i32
    return %c0_i32, %c0_i32_0 : i32, i32
  }
  func.func @transform_9(%arg0: i32) -> (i32, i32) {
    %c0_i32 = arith.constant 0 : i32
    %c0_i32_0 = arith.constant 0 : i32
    %c0_i32_1 = arith.constant 0 : i32
    return %c0_i32, %c0_i32_0 : i32, i32
  }
  func.func @transform_10(%arg0: i32) -> (i32, i32) {
    %c0_i32 = arith.constant 0 : i32
    %c0_i32_0 = arith.constant 0 : i32
    %c0_i32_1 = arith.constant 0 : i32
    return %c0_i32, %c0_i32_0 : i32, i32
  }
  func.func @transform_11(%arg0: i32) -> (i32, i32) {
    %c0_i32 = arith.constant 0 : i32
    %c0_i32_0 = arith.constant 0 : i32
    %c0_i32_1 = arith.constant 0 : i32
    return %c0_i32, %c0_i32_0 : i32, i32
  }
  func.func @transform_12(%arg0: i32) -> (i32, i32) {
    %c0_i32 = arith.constant 0 : i32
    %c0_i32_0 = arith.constant 0 : i32
    %c0_i32_1 = arith.constant 0 : i32
    return %c0_i32, %c0_i32_0 : i32, i32
  }
  func.func @transform_13(%arg0: i32) -> (i32, i32) {
    %c0_i32 = arith.constant 0 : i32
    %c0_i32_0 = arith.constant 0 : i32
    return %arg0, %c0_i32 : i32, i32
  }
}

</mosaic_0001>

<llo_original>
// kernel: mixer_layer.1
$region0: #{mixer_layer.1}
  #allocation0 [shape = 'u32[]', space=smem, size = 0x4, offset = 0x4, fixed_abs, tag = 'smem constant byte address 0x4 - core index']
  #allocation1 [shape = 'u32[144,128]{1,0:T(1,128)}', space=vmem, size = 0x12000, scoped, tag = 'internal scratch']
  %s0 = inlined_call_operand.vmem [shape: f32[32,32], index: 0, kind: input, shape index: {}]
  %s1 = inlined_call_operand.vmem [shape: f32[1,32], index: 1, kind: input, shape index: {}]
  %s2 = inlined_call_operand.vmem [shape: f32[1,32], index: 2, kind: input, shape index: {}]
  %s3 = inlined_call_operand.vmem [shape: f32[1,32], index: 3, kind: input, shape index: {}]
  %s4 = inlined_call_operand.vmem [shape: f32[1,32], index: 4, kind: input, shape index: {}]
  %s5 = inlined_call_operand.vmem [shape: f32[16,64], index: 5, kind: input, shape index: {}]
  %s6 = inlined_call_operand.vmem [shape: f32[1,64], index: 6, kind: input, shape index: {}]
  %s7 = inlined_call_operand.vmem [shape: f32[64,16], index: 7, kind: input, shape index: {}]
  %s8 = inlined_call_operand.vmem [shape: f32[1,16], index: 8, kind: input, shape index: {}]
  %s9 = inlined_call_operand.vmem [shape: f32[32,64], index: 9, kind: input, shape index: {}]
  %s10 = inlined_call_operand.vmem [shape: f32[1,64], index: 10, kind: input, shape index: {}]
  %s11 = inlined_call_operand.vmem [shape: f32[64,32], index: 11, kind: input, shape index: {}]
  %s12 = inlined_call_operand.vmem [shape: f32[1,32], index: 12, kind: input, shape index: {}]
  %s13 = inlined_call_operand.hbm [shape: f32[32,32], index: 13, kind: output, shape index: {}]
  %s14 = sld [smem:[#allocation0]]
  $region85: #{mixer_layer.1} parent=0
    _
  %s16 = ssub.s32 1, %s14
  %s17 = scalar_select 0, %s16, %s14
  $region1: #{mixer_layer.1} parent=0
    #allocation2 [shape = 'u8[16384]{0}', space=vmem, size = 0x4000, scoped, tag = 'output window, operand 0']
    #allocation3 [shape = 's32[2]{0}', space=sflag, size = 0x8, scoped, tag = 'scoped memory for mixer_layer.1']
    %18 = vsyncpa [#allocation3], 0
    %s19 = scalar_lea.sflag [#allocation3], 1
    %20 = vsyncpa %s19, 0
    loop: start=0, step=1, limit=4
    $region2: #{mixer_layer.1} parent=1 // loop_pre_header
      _
    $region3: #{mixer_layer.1} parent=1 // loop_header
      %s22 = sphi 0, %s26
      %p23 = scmp.ge.s32.totalorder %s22, 4
      %s32 = sphi 0, %s34
      %s35 = sphi 0, %s32
      %s36 = sphi 0, %s35
      %s52 = sphi 0, %s36
      %s56 = sphi 0, %s56
      %s58 = sphi 0, %s56
      %s59 = sphi 0, %s58
      %s73 = sphi 0, %s59
      %s77 = sphi 0, %s77
      %s79 = sphi 0, %s77
      %s80 = sphi 0, %s79
      %s94 = sphi 0, %s80
      %s98 = sphi 0, %s98
      %s100 = sphi 0, %s98
      %s101 = sphi 0, %s100
      %s115 = sphi 0, %s101
      %s119 = sphi 0, %s119
      %s121 = sphi 0, %s119
      %s122 = sphi 0, %s121
      %s136 = sphi 0, %s122
      %s140 = sphi 0, %s140
      %s142 = sphi 0, %s140
      %s143 = sphi 0, %s142
      %s157 = sphi 0, %s143
      %s161 = sphi 0, %s161
      %s163 = sphi 0, %s161
      %s164 = sphi 0, %s163
      %s178 = sphi 0, %s164
      %s182 = sphi 0, %s182
      %s184 = sphi 0, %s182
      %s185 = sphi 0, %s184
      %s199 = sphi 0, %s185
      %s203 = sphi 0, %s203
      %s205 = sphi 0, %s203
      %s206 = sphi 0, %s205
      %s220 = sphi 0, %s206
      %s224 = sphi 0, %s224
      %s226 = sphi 0, %s224
      %s227 = sphi 0, %s226
      %s241 = sphi 0, %s227
      %s245 = sphi 0, %s245
      %s247 = sphi 0, %s245
      %s248 = sphi 0, %s247
      %s262 = sphi 0, %s248
      %s266 = sphi 0, %s266
      %s268 = sphi 0, %s266
      %s269 = sphi 0, %s268
      %s283 = sphi 0, %s269
      %s287 = sphi 0, %s287
      %s289 = sphi 0, %s287
      %s290 = sphi 0, %s289
      %s304 = sphi 0, %s290
      %s310 = sphi 0, %s312
      %s313 = sphi 0, %s310
      %s314 = sphi 0, %s313
      %s330 = sphi 0, %s314
    $region4: #{mixer_layer.1} parent=1 // loop_header_branch
      %25 = sbr.rel (%p23) target = $region8
    $region5: #{mixer_layer.1} parent=1 // loop_body
      %s27 = ssub.s32 %s22, 1
      %s28 = ssub.s32 %s22, 2
      %s29 = sadd.s32 %s22, 1
      %s30 = ssub.s32 %s22, %s29
      %p31 = scmp.eq.s32.totalorder %s30, 0
      %s33 = sadd.s32 %s32, 1
      %s34 = scalar_select %p31, %s32, %s33
      %p37 = pneg %p31
      %p38 = scmp.eq.s32.totalorder %s22, 1
      %p39 = por %p37, %p38
      %p40 = scmp.ne.s32.totalorder %s32, %s35
      %p41 = scmp.eq.s32.totalorder %s22, 0
      %p42 = por %p40, %p41
      %p43 = scmp.ne.s32.totalorder %s32, %s35
      %p44 = scmp.eq.s32.totalorder %s27, 1
      %p45 = por %p43, %p44
      %p46 = scmp.ne.s32.totalorder %s35, %s36
      %p47 = scmp.eq.s32.totalorder %s27, 0
      %p48 = por %p46, %p47
      %p49 = scmp.ne.s32.totalorder %s35, %s36
      %p50 = scmp.eq.s32.totalorder %s28, 1
      %p51 = por %p49, %p50
      %p53 = scmp.ne.s32.totalorder %s36, %s52
      %p54 = scmp.eq.s32.totalorder %s28, 0
      %p55 = por %p53, %p54
      %s57 = sadd.s32 %s56, 1
      %p60 = scmp.eq.s32.totalorder %s22, 1
      %p61 = scmp.ne.s32.totalorder %s56, %s58
      %p62 = scmp.eq.s32.totalorder %s22, 0
      %p63 = por %p61, %p62
      %p64 = scmp.ne.s32.totalorder %s56, %s58
      %p65 = scmp.eq.s32.totalorder %s27, 1
      %p66 = por %p64, %p65
      %p67 = scmp.ne.s32.totalorder %s58, %s59
      %p68 = scmp.eq.s32.totalorder %s27, 0
      %p69 = por %p67, %p68
      %p70 = scmp.ne.s32.totalorder %s58, %s59
      %p71 = scmp.eq.s32.totalorder %s28, 1
      %p72 = por %p70, %p71
      %p74 = scmp.ne.s32.totalorder %s59, %s73
      %p75 = scmp.eq.s32.totalorder %s28, 0
      %p76 = por %p74, %p75
      %s78 = sadd.s32 %s77, 1
      %p81 = scmp.eq.s32.totalorder %s22, 1
      %p82 = scmp.ne.s32.totalorder %s77, %s79
      %p83 = scmp.eq.s32.totalorder %s22, 0
      %p84 = por %p82, %p83
      %p85 = scmp.ne.s32.totalorder %s77, %s79
      %p86 = scmp.eq.s32.totalorder %s27, 1
      %p87 = por %p85, %p86
      %p88 = scmp.ne.s32.totalorder %s79, %s80
      %p89 = scmp.eq.s32.totalorder %s27, 0
      %p90 = por %p88, %p89
      %p91 = scmp.ne.s32.totalorder %s79, %s80
      %p92 = scmp.eq.s32.totalorder %s28, 1
      %p93 = por %p91, %p92
      %p95 = scmp.ne.s32.totalorder %s80, %s94
      %p96 = scmp.eq.s32.totalorder %s28, 0
      %p97 = por %p95, %p96
      %s99 = sadd.s32 %s98, 1
      %p102 = scmp.eq.s32.totalorder %s22, 1
      %p103 = scmp.ne.s32.totalorder %s98, %s100
      %p104 = scmp.eq.s32.totalorder %s22, 0
      %p105 = por %p103, %p104
      %p106 = scmp.ne.s32.totalorder %s98, %s100
      %p107 = scmp.eq.s32.totalorder %s27, 1
      %p108 = por %p106, %p107
      %p109 = scmp.ne.s32.totalorder %s100, %s101
      %p110 = scmp.eq.s32.totalorder %s27, 0
      %p111 = por %p109, %p110
      %p112 = scmp.ne.s32.totalorder %s100, %s101
      %p113 = scmp.eq.s32.totalorder %s28, 1
      %p114 = por %p112, %p113
      %p116 = scmp.ne.s32.totalorder %s101, %s115
      %p117 = scmp.eq.s32.totalorder %s28, 0
      %p118 = por %p116, %p117
      %s120 = sadd.s32 %s119, 1
      %p123 = scmp.eq.s32.totalorder %s22, 1
      %p124 = scmp.ne.s32.totalorder %s119, %s121
      %p125 = scmp.eq.s32.totalorder %s22, 0
      %p126 = por %p124, %p125
      %p127 = scmp.ne.s32.totalorder %s119, %s121
      %p128 = scmp.eq.s32.totalorder %s27, 1
      %p129 = por %p127, %p128
      %p130 = scmp.ne.s32.totalorder %s121, %s122
      %p131 = scmp.eq.s32.totalorder %s27, 0
      %p132 = por %p130, %p131
      %p133 = scmp.ne.s32.totalorder %s121, %s122
      %p134 = scmp.eq.s32.totalorder %s28, 1
      %p135 = por %p133, %p134
      %p137 = scmp.ne.s32.totalorder %s122, %s136
      %p138 = scmp.eq.s32.totalorder %s28, 0
      %p139 = por %p137, %p138
      %s141 = sadd.s32 %s140, 1
      %p144 = scmp.eq.s32.totalorder %s22, 1
      %p145 = scmp.ne.s32.totalorder %s140, %s142
      %p146 = scmp.eq.s32.totalorder %s22, 0
      %p147 = por %p145, %p146
      %p148 = scmp.ne.s32.totalorder %s140, %s142
      %p149 = scmp.eq.s32.totalorder %s27, 1
      %p150 = por %p148, %p149
      %p151 = scmp.ne.s32.totalorder %s142, %s143
      %p152 = scmp.eq.s32.totalorder %s27, 0
      %p153 = por %p151, %p152
      %p154 = scmp.ne.s32.totalorder %s142, %s143
      %p155 = scmp.eq.s32.totalorder %s28, 1
      %p156 = por %p154, %p155
      %p158 = scmp.ne.s32.totalorder %s143, %s157
      %p159 = scmp.eq.s32.totalorder %s28, 0
      %p160 = por %p158, %p159
      %s162 = sadd.s32 %s161, 1
      %p165 = scmp.eq.s32.totalorder %s22, 1
      %p166 = scmp.ne.s32.totalorder %s161, %s163
      %p167 = scmp.eq.s32.totalorder %s22, 0
      %p168 = por %p166, %p167
      %p169 = scmp.ne.s32.totalorder %s161, %s163
      %p170 = scmp.eq.s32.totalorder %s27, 1
      %p171 = por %p169, %p170
      %p172 = scmp.ne.s32.totalorder %s163, %s164
      %p173 = scmp.eq.s32.totalorder %s27, 0
      %p174 = por %p172, %p173
      %p175 = scmp.ne.s32.totalorder %s163, %s164
      %p176 = scmp.eq.s32.totalorder %s28, 1
      %p177 = por %p175, %p176
      %p179 = scmp.ne.s32.totalorder %s164, %s178
      %p180 = scmp.eq.s32.totalorder %s28, 0
      %p181 = por %p179, %p180
      %s183 = sadd.s32 %s182, 1
      %p186 = scmp.eq.s32.totalorder %s22, 1
      %p187 = scmp.ne.s32.totalorder %s182, %s184
      %p188 = scmp.eq.s32.totalorder %s22, 0
      %p189 = por %p187, %p188
      %p190 = scmp.ne.s32.totalorder %s182, %s184
      %p191 = scmp.eq.s32.totalorder %s27, 1
      %p192 = por %p190, %p191
      %p193 = scmp.ne.s32.totalorder %s184, %s185
      %p194 = scmp.eq.s32.totalorder %s27, 0
      %p195 = por %p193, %p194
      %p196 = scmp.ne.s32.totalorder %s184, %s185
      %p197 = scmp.eq.s32.totalorder %s28, 1
      %p198 = por %p196, %p197
      %p200 = scmp.ne.s32.totalorder %s185, %s199
      %p201 = scmp.eq.s32.totalorder %s28, 0
      %p202 = por %p200, %p201
      %s204 = sadd.s32 %s203, 1
      %p207 = scmp.eq.s32.totalorder %s22, 1
      %p208 = scmp.ne.s32.totalorder %s203, %s205
      %p209 = scmp.eq.s32.totalorder %s22, 0
      %p210 = por %p208, %p209
      %p211 = scmp.ne.s32.totalorder %s203, %s205
      %p212 = scmp.eq.s32.totalorder %s27, 1
      %p213 = por %p211, %p212
      %p214 = scmp.ne.s32.totalorder %s205, %s206
      %p215 = scmp.eq.s32.totalorder %s27, 0
      %p216 = por %p214, %p215
      %p217 = scmp.ne.s32.totalorder %s205, %s206
      %p218 = scmp.eq.s32.totalorder %s28, 1
      %p219 = por %p217, %p218
      %p221 = scmp.ne.s32.totalorder %s206, %s220
      %p222 = scmp.eq.s32.totalorder %s28, 0
      %p223 = por %p221, %p222
      %s225 = sadd.s32 %s224, 1
      %p228 = scmp.eq.s32.totalorder %s22, 1
      %p229 = scmp.ne.s32.totalorder %s224, %s226
      %p230 = scmp.eq.s32.totalorder %s22, 0
      %p231 = por %p229, %p230
      %p232 = scmp.ne.s32.totalorder %s224, %s226
      %p233 = scmp.eq.s32.totalorder %s27, 1
      %p234 = por %p232, %p233
      %p235 = scmp.ne.s32.totalorder %s226, %s227
      %p236 = scmp.eq.s32.totalorder %s27, 0
      %p237 = por %p235, %p236
      %p238 = scmp.ne.s32.totalorder %s226, %s227
      %p239 = scmp.eq.s32.totalorder %s28, 1
      %p240 = por %p238, %p239
      %p242 = scmp.ne.s32.totalorder %s227, %s241
      %p243 = scmp.eq.s32.totalorder %s28, 0
      %p244 = por %p242, %p243
      %s246 = sadd.s32 %s245, 1
      %p249 = scmp.eq.s32.totalorder %s22, 1
      %p250 = scmp.ne.s32.totalorder %s245, %s247
      %p251 = scmp.eq.s32.totalorder %s22, 0
      %p252 = por %p250, %p251
      %p253 = scmp.ne.s32.totalorder %s245, %s247
      %p254 = scmp.eq.s32.totalorder %s27, 1
      %p255 = por %p253, %p254
      %p256 = scmp.ne.s32.totalorder %s247, %s248
      %p257 = scmp.eq.s32.totalorder %s27, 0
      %p258 = por %p256, %p257
      %p259 = scmp.ne.s32.totalorder %s247, %s248
      %p260 = scmp.eq.s32.totalorder %s28, 1
      %p261 = por %p259, %p260
      %p263 = scmp.ne.s32.totalorder %s248, %s262
      %p264 = scmp.eq.s32.totalorder %s28, 0
      %p265 = por %p263, %p264
      %s267 = sadd.s32 %s266, 1
      %p270 = scmp.eq.s32.totalorder %s22, 1
      %p271 = scmp.ne.s32.totalorder %s266, %s268
      %p272 = scmp.eq.s32.totalorder %s22, 0
      %p273 = por %p271, %p272
      %p274 = scmp.ne.s32.totalorder %s266, %s268
      %p275 = scmp.eq.s32.totalorder %s27, 1
      %p276 = por %p274, %p275
      %p277 = scmp.ne.s32.totalorder %s268, %s269
      %p278 = scmp.eq.s32.totalorder %s27, 0
      %p279 = por %p277, %p278
      %p280 = scmp.ne.s32.totalorder %s268, %s269
      %p281 = scmp.eq.s32.totalorder %s28, 1
      %p282 = por %p280, %p281
      %p284 = scmp.ne.s32.totalorder %s269, %s283
      %p285 = scmp.eq.s32.totalorder %s28, 0
      %p286 = por %p284, %p285
      %s288 = sadd.s32 %s287, 1
      %p291 = scmp.eq.s32.totalorder %s22, 1
      %p292 = scmp.ne.s32.totalorder %s287, %s289
      %p293 = scmp.eq.s32.totalorder %s22, 0
      %p294 = por %p292, %p293
      %p295 = scmp.ne.s32.totalorder %s287, %s289
      %p296 = scmp.eq.s32.totalorder %s27, 1
      %p297 = por %p295, %p296
      %p298 = scmp.ne.s32.totalorder %s289, %s290
      %p299 = scmp.eq.s32.totalorder %s27, 0
      %p300 = por %p298, %p299
      %p301 = scmp.ne.s32.totalorder %s289, %s290
      %p302 = scmp.eq.s32.totalorder %s28, 1
      %p303 = por %p301, %p302
      %p305 = scmp.ne.s32.totalorder %s290, %s304
      %p306 = scmp.eq.s32.totalorder %s28, 0
      %p307 = por %p305, %p306
      %s308 = ssub.s32 %s22, %s29
      %p309 = scmp.eq.s32.totalorder %s308, 0
      %s311 = sadd.s32 %s310, 1
      %s312 = scalar_select %p309, %s310, %s311
      %p315 = pneg %p309
      %p316 = scmp.eq.s32.totalorder %s22, 1
      %p317 = por %p315, %p316
      %p318 = scmp.ne.s32.totalorder %s310, %s313
      %p319 = scmp.eq.s32.totalorder %s22, 0
      %p320 = por %p318, %p319
      %p321 = scmp.ne.s32.totalorder %s310, %s313
      %p322 = scmp.eq.s32.totalorder %s27, 1
      %p323 = por %p321, %p322
      %p324 = scmp.ne.s32.totalorder %s313, %s314
      %p325 = scmp.eq.s32.totalorder %s27, 0
      %p326 = por %p324, %p325
      %p327 = scmp.ne.s32.totalorder %s313, %s314
      %p328 = scmp.eq.s32.totalorder %s28, 1
      %p329 = por %p327, %p328
      %p331 = scmp.ne.s32.totalorder %s314, %s330
      %p332 = scmp.eq.s32.totalorder %s28, 0
      %p333 = por %p331, %p332
      %p334 = scmp.le.s32.totalorder 1, %s22
      %p335 = scmp.lt.s32.totalorder %s22, 3
      %p336 = pnand %p334, %p335
      %p337 = pneg %p336
      // Predicated region
      $region9: #{mixer_layer.1} parent=5 // pred_check
        _
      $region10: #{mixer_layer.1} parent=5 // pred_check_branch
        %339 = sbr.rel (%p336) target = $region12
      $region11: #{mixer_layer.1} parent=5 // pred_region
        %s340 = ssub.s32 %s22, 1
        // Predicated region
        $region13: #{mixer_layer.1} parent=11 // pred_check
          %p341 = pneg %p69
        $region14: #{mixer_layer.1} parent=11 // pred_check_branch
          %343 = sbr.rel (%p341) target = $region16
        $region15: #{mixer_layer.1} parent=11 // pred_region
          _
        $region16: #{mixer_layer.1} parent=11 // pred_fallthru
          _
        // Predicated region
        $region17: #{mixer_layer.1} parent=11 // pred_check
          %p344 = pneg %p90
        $region18: #{mixer_layer.1} parent=11 // pred_check_branch
          %346 = sbr.rel (%p344) target = $region20
        $region19: #{mixer_layer.1} parent=11 // pred_region
          _
        $region20: #{mixer_layer.1} parent=11 // pred_fallthru
          _
        // Predicated region
        $region21: #{mixer_layer.1} parent=11 // pred_check
          %p347 = pneg %p111
        $region22: #{mixer_layer.1} parent=11 // pred_check_branch
          %349 = sbr.rel (%p347) target = $region24
        $region23: #{mixer_layer.1} parent=11 // pred_region
          _
        $region24: #{mixer_layer.1} parent=11 // pred_fallthru
          _
        // Predicated region
        $region25: #{mixer_layer.1} parent=11 // pred_check
          %p350 = pneg %p132
        $region26: #{mixer_layer.1} parent=11 // pred_check_branch
          %352 = sbr.rel (%p350) target = $region28
        $region27: #{mixer_layer.1} parent=11 // pred_region
          _
        $region28: #{mixer_layer.1} parent=11 // pred_fallthru
          _
        // Predicated region
        $region29: #{mixer_layer.1} parent=11 // pred_check
          %p353 = pneg %p153
        $region30: #{mixer_layer.1} parent=11 // pred_check_branch
          %355 = sbr.rel (%p353) target = $region32
        $region31: #{mixer_layer.1} parent=11 // pred_region
          _
        $region32: #{mixer_layer.1} parent=11 // pred_fallthru
          _
        // Predicated region
        $region33: #{mixer_layer.1} parent=11 // pred_check
          %p356 = pneg %p174
        $region34: #{mixer_layer.1} parent=11 // pred_check_branch
          %358 = sbr.rel (%p356) target = $region36
        $region35: #{mixer_layer.1} parent=11 // pred_region
          _
        $region36: #{mixer_layer.1} parent=11 // pred_fallthru
          _
        // Predicated region
        $region37: #{mixer_layer.1} parent=11 // pred_check
          %p359 = pneg %p195
        $region38: #{mixer_layer.1} parent=11 // pred_check_branch
          %361 = sbr.rel (%p359) target = $region40
        $region39: #{mixer_layer.1} parent=11 // pred_region
          _
        $region40: #{mixer_layer.1} parent=11 // pred_fallthru
          _
        // Predicated region
        $region41: #{mixer_layer.1} parent=11 // pred_check
          %p362 = pneg %p216
        $region42: #{mixer_layer.1} parent=11 // pred_check_branch
          %364 = sbr.rel (%p362) target = $region44
        $region43: #{mixer_layer.1} parent=11 // pred_region
          _
        $region44: #{mixer_layer.1} parent=11 // pred_fallthru
          _
        // Predicated region
        $region45: #{mixer_layer.1} parent=11 // pred_check
          %p365 = pneg %p237
        $region46: #{mixer_layer.1} parent=11 // pred_check_branch
          %367 = sbr.rel (%p365) target = $region48
        $region47: #{mixer_layer.1} parent=11 // pred_region
          _
        $region48: #{mixer_layer.1} parent=11 // pred_fallthru
          _
        // Predicated region
        $region49: #{mixer_layer.1} parent=11 // pred_check
          %p368 = pneg %p258
        $region50: #{mixer_layer.1} parent=11 // pred_check_branch
          %370 = sbr.rel (%p368) target = $region52
        $region51: #{mixer_layer.1} parent=11 // pred_region
          _
        $region52: #{mixer_layer.1} parent=11 // pred_fallthru
          _
        // Predicated region
        $region53: #{mixer_layer.1} parent=11 // pred_check
          %p371 = pneg %p279
        $region54: #{mixer_layer.1} parent=11 // pred_check_branch
          %373 = sbr.rel (%p371) target = $region56
        $region55: #{mixer_layer.1} parent=11 // pred_region
          _
        $region56: #{mixer_layer.1} parent=11 // pred_fallthru
          _
        // Predicated region
        $region57: #{mixer_layer.1} parent=11 // pred_check
          %p374 = pneg %p300
        $region58: #{mixer_layer.1} parent=11 // pred_check_branch
          %376 = sbr.rel (%p374) target = $region60
        $region59: #{mixer_layer.1} parent=11 // pred_region
          _
        $region60: #{mixer_layer.1} parent=11 // pred_fallthru
          _
      $region12: #{mixer_layer.1} parent=5 // pred_fallthru
        _
      %p377 = scmp.lt.s32.totalorder %s22, 2
      // Predicated region
      $region61: #{mixer_layer.1} parent=5 // pred_check
        %p378 = pneg %p377
      $region62: #{mixer_layer.1} parent=5 // pred_check_branch
        %380 = sbr.rel (%p378) target = $region64
      $region63: #{mixer_layer.1} parent=5 // pred_region
        // Predicated region
        $region65: #{mixer_layer.1} parent=63 // pred_check
          %p381 = pneg %p42
        $region66: #{mixer_layer.1} parent=63 // pred_check_branch
          %383 = sbr.rel (%p381) target = $region68
        $region67: #{mixer_layer.1} parent=63 // pred_region
          %s384 = smul.u32 2, %s22
          %p385 = scmp.lt.s32.totalorder %s384, 3
          %s386 = scalar_select %p385, %s384, 3
          %s387 = smul.addr %s386, 8
          %s388 = scalar_lea.vmem %s0, %s387
          %s389 = smul.u32 2, %s22
        $region68: #{mixer_layer.1} parent=63 // pred_fallthru
          _
      $region64: #{mixer_layer.1} parent=5 // pred_fallthru
        _
      %p390 = scmp.le.s32.totalorder 1, %s22
      %p391 = scmp.lt.s32.totalorder %s22, 3
      %p392 = pnand %p390, %p391
      %p393 = pneg %p392
      // Predicated region
      $region69: #{mixer_layer.1} parent=5 // pred_check
        _
      $region70: #{mixer_layer.1} parent=5 // pred_check_branch
        %395 = sbr.rel (%p392) target = $region72
      $region71: #{mixer_layer.1} parent=5 // pred_region
        %s396 = ssub.s32 %s22, 1
        %s397 = smul.u32 2, %s27
        %p398 = scmp.lt.s32.totalorder %s397, 3
        %s399 = scalar_select %p398, %s397, 3
        %s400 = smul.addr %s399, 8
        %s401 = scalar_lea.vmem %s0, %s400
        %p402 = pneg %p48
        %p403 = pneg %p45
        %p404 = pneg %p69
        %p405 = pneg %p66
        %p406 = pneg %p90
        %p407 = pneg %p87
        %p408 = pneg %p111
        %p409 = pneg %p108
        %p410 = pneg %p132
        %p411 = pneg %p129
        %p412 = pneg %p153
        %p413 = pneg %p150
        %p414 = pneg %p174
        %p415 = pneg %p171
        %p416 = pneg %p195
        %p417 = pneg %p192
        %p418 = pneg %p216
        %p419 = pneg %p213
        %p420 = pneg %p237
        %p421 = pneg %p234
        %p422 = pneg %p258
        %p423 = pneg %p255
        %p424 = pneg %p279
        %p425 = pneg %p276
        %p426 = pneg %p300
        %p427 = pneg %p297
        %p428 = pneg %p326
        %p429 = pneg %p323
        %s430 = sand.u32 %s313, 1
        %s431 = scalar_lea.sflag [#allocation3], %s430
        %s432 = sand.u32 %s313, 1
        %s433 = smul.addr %s432, 16
        %s434 = scalar_lea.vmem [#allocation2], %s433
        %s435 = smul.u32 2, %s27
        %p436 = scmp.lt.s32.totalorder %s435, 3
        %s437 = scalar_select %p436, %s435, 3
        %s438 = smul.addr %s437, 8
        %s439 = scalar_lea.vmem %s0, %s438
        %s440 = smul.u32 2, %s27
        %s441 = smul.u32 2, %s27
        %v442 = vld [vmem:[%s439] sm:$0xff]
        %v443 = vld [vmem:[%s439 + $0x8] sm:$0xff]
        %v444 = vld [vmem:[%s1] sm:$0x1]
        %v445 = vld [vmem:[%s2] sm:$0x1]
        %vm446 = vcmask 261120
        %v447 = vsel %vm446, %v442, 0.0
        %448 = vadd.xlane.f32.xlu0 %v447
        %v449 = vpop.xlane.xlu0 %448
        %v450 = vsel %vm446, %v443, 0.0
        %451 = vadd.xlane.f32.xlu0 %v450
        %v452 = vpop.xlane.xlu0 %451
        %v453 = vrcp.pop 32.0
        %v454 = vmul.f32 %v449, %v453
        %v455 = vmul.f32 %v452, %v453
        %v456 = vsub.f32 %v442, %v454
        %v457 = vsub.f32 %v443, %v455
        %v458 = vmul.f32 %v456, %v456
        %v459 = vmul.f32 %v457, %v457
        %v460 = vsel %vm446, %v458, 0.0
        %461 = vadd.xlane.f32.xlu0 %v460
        %v462 = vpop.xlane.xlu0 %461
        %v463 = vsel %vm446, %v459, 0.0
        %464 = vadd.xlane.f32.xlu0 %v463
        %v465 = vpop.xlane.xlu0 %464
        %v466 = vmul.f32 %v462, %v453
        %v467 = vmul.f32 %v465, %v453
        %v468 = vadd.f32 %v466, 1e-05
        %v469 = vadd.f32 %v467, 1e-05
        %v470 = vrsqrt.pop %v468
        %v471 = vrsqrt.pop %v469
        %v472 = vmul.f32 %v456, %v470
        %v473 = vmul.f32 %v457, %v471
        %v475 = vlaneseq
        %v476 = vshrl.u32 %v475, 7
        %v477 = vsub.s32 0, %v476
        %v478 = vrot.slane %v444, %v477
        %v480 = vmul.f32 %v472, %v478
        %v481 = vmul.f32 %v473, %v478
        %v483 = vlaneseq
        %v484 = vshrl.u32 %v483, 7
        %v485 = vsub.s32 0, %v484
        %v486 = vrot.slane %v445, %v485
        %v488 = vadd.f32 %v480, %v486
        %v489 = vadd.f32 %v481, %v486
        %490 = vxpose.xlu0.b32.start [1/16] %v488, 128
        %491 = vxpose.xlu0.b32.cont [2/16] %v489, 128
        %492 = vxpose.xlu0.b32.cont [3/16] 0.0, 128
        %493 = vxpose.xlu0.b32.cont [4/16] 0.0, 128
        %494 = vxpose.xlu0.b32.cont [5/16] 0.0, 128
        %495 = vxpose.xlu0.b32.cont [6/16] 0.0, 128
        %496 = vxpose.xlu0.b32.cont [7/16] 0.0, 128
        %497 = vxpose.xlu0.b32.cont [8/16] 0.0, 128
        %498 = vxpose.xlu0.b32.cont [9/16] 0.0, 128
        %499 = vxpose.xlu0.b32.cont [10/16] 0.0, 128
        %500 = vxpose.xlu0.b32.cont [11/16] 0.0, 128
        %501 = vxpose.xlu0.b32.cont [12/16] 0.0, 128
        %502 = vxpose.xlu0.b32.cont [13/16] 0.0, 128
        %503 = vxpose.xlu0.b32.cont [14/16] 0.0, 128
        %504 = vxpose.xlu0.b32.cont [15/16] 0.0, 128
        %505 = vxpose.xlu0.b32.end [16/16] 0.0, 128
        %v506 = vpop.trf.xlu0
        %v507 = vpop.trf.xlu0
        %v508 = vpop.trf.xlu0
        %v509 = vpop.trf.xlu0
        %v510 = vpop.trf.xlu0
        %v511 = vpop.trf.xlu0
        %v512 = vpop.trf.xlu0
        %v513 = vpop.trf.xlu0
        %v514 = vpop.trf.xlu0
        %v515 = vpop.trf.xlu0
        %v516 = vpop.trf.xlu0
        %v517 = vpop.trf.xlu0
        %v518 = vpop.trf.xlu0
        %v519 = vpop.trf.xlu0
        %v520 = vpop.trf.xlu0
        %v521 = vpop.trf.xlu0
        %v522 = vld [vmem:[%s5] sm:$0xff]
        %v523 = vld [vmem:[%s5 + $0x8] sm:$0xff]
        %v524 = vld [vmem:[%s6] sm:$0x1]
        %v526 = vlaneseq
        %v527 = vshrl.u32 %v526, 7
        %v528 = vsub.s32 0, %v527
        %v529 = vrot.slane %v524, %v528
        %vm531 = vcmask 130048
        %v533 = vsel %vm531, %v506, 0
        %v536 = vsel %vm531, %v507, 0
        %v539 = vsel %vm531, %v508, 0
        %v542 = vsel %vm531, %v509, 0
        %544 = vmatprep.subr.mxu0 0.0
        %545 = vmatpush1.msra.mxu0 %v522
        %546 = vmatprep.subr.mxu0 0.0
        %547 = vmatpush1.msra.mxu0 %v523
        %548 = vmatprep.subr.mxu0 0.0
        %549 = vmatpush1.msra.mxu0 0.0
        %550 = vmatprep.subr.mxu0 0.0
        %551 = vmatpush1.msra.mxu0 0.0
        %552 = vmatprep.subr.mxu0 0.0
        %553 = vmatpush1.msra.mxu0 0.0
        %554 = vmatprep.subr.mxu0 0.0
        %555 = vmatpush1.msra.mxu0 0.0
        %556 = vmatprep.subr.mxu0 0.0
        %557 = vmatpush1.msra.mxu0 0.0
        %558 = vmatprep.subr.mxu0 0.0
        %559 = vmatpush1.msra.mxu0 0.0
        %560 = vmatprep.subr.mxu0 0.0
        %561 = vmatpush1.msra.mxu0 0.0
        %562 = vmatprep.subr.mxu0 0.0
        %563 = vmatpush1.msra.mxu0 0.0
        %564 = vmatprep.subr.mxu0 0.0
        %565 = vmatpush1.msra.mxu0 0.0
        %566 = vmatprep.subr.mxu0 0.0
        %567 = vmatpush1.msra.mxu0 0.0
        %568 = vmatprep.subr.mxu0 0.0
        %569 = vmatpush1.msra.mxu0 0.0
        %570 = vmatprep.subr.mxu0 0.0
        %571 = vmatpush1.msra.mxu0 0.0
        %572 = vmatprep.subr.mxu0 0.0
        %573 = vmatpush1.msra.mxu0 0.0
        %574 = vmatprep.subr.mxu0 0.0
        %575 = vmatpush1.msra.mxu0 0.0
        %576 = vmatprep.subr.mxu0 0.0
        %577 = vmatpush1.msra.mxu0 0.0
        %578 = vmatprep.subr.mxu0 0.0
        %579 = vmatpush1.msra.mxu0 0.0
        %580 = vmatprep.subr.mxu0 0.0
        %581 = vmatpush1.msra.mxu0 0.0
        %582 = vmatprep.subr.mxu0 0.0
        %583 = vmatpush1.msra.mxu0 0.0
        %584 = vmatprep.subr.mxu0 0.0
        %585 = vmatpush1.msra.mxu0 0.0
        %586 = vmatprep.subr.mxu0 0.0
        %587 = vmatpush1.msra.mxu0 0.0
        %588 = vmatprep.subr.mxu0 0.0
        %589 = vmatpush1.msra.mxu0 0.0
        %590 = vmatprep.subr.mxu0 0.0
        %591 = vmatpush1.msra.mxu0 0.0
        %592 = vmatprep.subr.mxu0 0.0
        %593 = vmatpush1.msra.mxu0 0.0
        %594 = vmatprep.subr.mxu0 0.0
        %595 = vmatpush1.msra.mxu0 0.0
        %596 = vmatprep.subr.mxu0 0.0
        %597 = vmatpush1.msra.mxu0 0.0
        %598 = vmatprep.subr.mxu0 0.0
        %599 = vmatpush1.msra.mxu0 0.0
        %600 = vmatprep.subr.mxu0 0.0
        %601 = vmatpush1.msra.mxu0 0.0
        %602 = vmatprep.subr.mxu0 0.0
        %603 = vmatpush1.msra.mxu0 0.0
        %604 = vmatprep.subr.mxu0 0.0
        %605 = vmatpush1.msra.mxu0 0.0
        %606 = vmatprep.subr.mxu0 0.0
        %607 = vmatpush1.msra.mxu0 0.0
        %608 = vmatprep.mubr.f32.mxu0 0.0
        %609 = vmatmul.mubr.f32.gmra.mrb[0].mxu0 %v533
        %v610 = vpop.f32.mrb[0].mxu0
        %v611 = vadd.f32 %v529, %v610
        %v612 = vpop.f32.mrb[0].mxu0
        %613 = vmatprep.mubr.f32.mxu0 0.0
        %614 = vmatmul.mubr.f32.gmra.mrb[0].mxu0 %v536
        %v615 = vpop.f32.mrb[0].mxu0
        %v616 = vadd.f32 %v529, %v615
        %v617 = vpop.f32.mrb[0].mxu0
        %618 = vmatprep.mubr.f32.mxu0 0.0
        %619 = vmatmul.mubr.f32.gmra.mrb[0].mxu0 %v539
        %v620 = vpop.f32.mrb[0].mxu0
        %v621 = vadd.f32 %v529, %v620
        %v622 = vpop.f32.mrb[0].mxu0
        %623 = vmatprep.mubr.f32.mxu0 0.0
        %624 = vmatmul.mubr.f32.gmra.mrb[0].mxu0 %v542
        %v625 = vpop.f32.mrb[0].mxu0
        %v626 = vadd.f32 %v529, %v625
        %v627 = vpop.f32.mrb[0].mxu0
        %628 = vdwg.mxu0
        %v629 = vmul.f32 %v611, 0.5
        %v630 = vmul.f32 %v616, 0.5
        %v631 = vmul.f32 %v621, 0.5
        %v632 = vmul.f32 %v626, 0.5
        %v633 = vmul.f32 %v611, 0.70710677
        %v634 = vmul.f32 %v616, 0.70710677
        %v635 = vmul.f32 %v621, 0.70710677
        %v636 = vmul.f32 %v626, 0.70710677
        %v637 = verf.f32.pop %v633
        %v638 = verf.f32.pop %v634
        %v639 = verf.f32.pop %v635
        %v640 = verf.f32.pop %v636
        %v641 = vadd.f32 %v637, 1.0
        %v642 = vadd.f32 %v638, 1.0
        %v643 = vadd.f32 %v639, 1.0
        %v644 = vadd.f32 %v640, 1.0
        %v645 = vmul.f32 %v629, %v641
        %v646 = vmul.f32 %v630, %v642
        %v647 = vmul.f32 %v631, %v643
        %v648 = vmul.f32 %v632, %v644
        %v649 = vld [vmem:[%s7] sm:$0xff]
        %v650 = vld [vmem:[%s7 + $0x8] sm:$0xff]
        %v651 = vld [vmem:[%s7 + $0x10] sm:$0xff]
        %v652 = vld [vmem:[%s7 + $0x18] sm:$0xff]
        %v653 = vld [vmem:[%s7 + $0x20] sm:$0xff]
        %v654 = vld [vmem:[%s7 + $0x28] sm:$0xff]
        %v655 = vld [vmem:[%s7 + $0x30] sm:$0xff]
        %v656 = vld [vmem:[%s7 + $0x38] sm:$0xff]
        %v657 = vld [vmem:[%s8] sm:$0x1]
        %v659 = vlaneseq
        %v660 = vshrl.u32 %v659, 7
        %v661 = vsub.s32 0, %v660
        %v662 = vrot.slane %v657, %v661
        %vm664 = vcmask 523264
        %v666 = vsel %vm664, %v645, 0
        %v669 = vsel %vm664, %v646, 0
        %v672 = vsel %vm664, %v647, 0
        %v675 = vsel %vm664, %v648, 0
        %677 = vmatprep.subr.mxu0 0.0
        %678 = vmatpush1.msra.mxu0 %v649
        %679 = vmatprep.subr.mxu0 0.0
        %680 = vmatpush1.msra.mxu0 %v650
        %681 = vmatprep.subr.mxu0 0.0
        %682 = vmatpush1.msra.mxu0 %v651
        %683 = vmatprep.subr.mxu0 0.0
        %684 = vmatpush1.msra.mxu0 %v652
        %685 = vmatprep.subr.mxu0 0.0
        %686 = vmatpush1.msra.mxu0 %v653
        %687 = vmatprep.subr.mxu0 0.0
        %688 = vmatpush1.msra.mxu0 %v654
        %689 = vmatprep.subr.mxu0 0.0
        %690 = vmatpush1.msra.mxu0 %v655
        %691 = vmatprep.subr.mxu0 0.0
        %692 = vmatpush1.msra.mxu0 %v656
        %693 = vmatprep.subr.mxu0 0.0
        %694 = vmatpush1.msra.mxu0 0.0
        %695 = vmatprep.subr.mxu0 0.0
        %696 = vmatpush1.msra.mxu0 0.0
        %697 = vmatprep.subr.mxu0 0.0
        %698 = vmatpush1.msra.mxu0 0.0
        %699 = vmatprep.subr.mxu0 0.0
        %700 = vmatpush1.msra.mxu0 0.0
        %701 = vmatprep.subr.mxu0 0.0
        %702 = vmatpush1.msra.mxu0 0.0
        %703 = vmatprep.subr.mxu0 0.0
        %704 = vmatpush1.msra.mxu0 0.0
        %705 = vmatprep.subr.mxu0 0.0
        %706 = vmatpush1.msra.mxu0 0.0
        %707 = vmatprep.subr.mxu0 0.0
        %708 = vmatpush1.msra.mxu0 0.0
        %709 = vmatprep.subr.mxu0 0.0
        %710 = vmatpush1.msra.mxu0 0.0
        %711 = vmatprep.subr.mxu0 0.0
        %712 = vmatpush1.msra.mxu0 0.0
        %713 = vmatprep.subr.mxu0 0.0
        %714 = vmatpush1.msra.mxu0 0.0
        %715 = vmatprep.subr.mxu0 0.0
        %716 = vmatpush1.msra.mxu0 0.0
        %717 = vmatprep.subr.mxu0 0.0
        %718 = vmatpush1.msra.mxu0 0.0
        %719 = vmatprep.subr.mxu0 0.0
        %720 = vmatpush1.msra.mxu0 0.0
        %721 = vmatprep.subr.mxu0 0.0
        %722 = vmatpush1.msra.mxu0 0.0
        %723 = vmatprep.subr.mxu0 0.0
        %724 = vmatpush1.msra.mxu0 0.0
        %725 = vmatprep.subr.mxu0 0.0
        %726 = vmatpush1.msra.mxu0 0.0
        %727 = vmatprep.subr.mxu0 0.0
        %728 = vmatpush1.msra.mxu0 0.0
        %729 = vmatprep.subr.mxu0 0.0
        %730 = vmatpush1.msra.mxu0 0.0
        %731 = vmatprep.subr.mxu0 0.0
        %732 = vmatpush1.msra.mxu0 0.0
        %733 = vmatprep.subr.mxu0 0.0
        %734 = vmatpush1.msra.mxu0 0.0
        %735 = vmatprep.subr.mxu0 0.0
        %736 = vmatpush1.msra.mxu0 0.0
        %737 = vmatprep.subr.mxu0 0.0
        %738 = vmatpush1.msra.mxu0 0.0
        %739 = vmatprep.subr.mxu0 0.0
        %740 = vmatpush1.msra.mxu0 0.0
        %741 = vmatprep.mubr.f32.mxu0 0.0
        %742 = vmatmul.mubr.f32.gmra.mrb[0].mxu0 %v666
        %v743 = vpop.f32.mrb[0].mxu0
        %v744 = vadd.f32 %v662, %v743
        %v745 = vpop.f32.mrb[0].mxu0
        %746 = vmatprep.mubr.f32.mxu0 0.0
        %747 = vmatmul.mubr.f32.gmra.mrb[0].mxu0 %v669
        %v748 = vpop.f32.mrb[0].mxu0
        %v749 = vadd.f32 %v662, %v748
        %v750 = vpop.f32.mrb[0].mxu0
        %751 = vmatprep.mubr.f32.mxu0 0.0
        %752 = vmatmul.mubr.f32.gmra.mrb[0].mxu0 %v672
        %v753 = vpop.f32.mrb[0].mxu0
        %v754 = vadd.f32 %v662, %v753
        %v755 = vpop.f32.mrb[0].mxu0
        %756 = vmatprep.mubr.f32.mxu0 0.0
        %757 = vmatmul.mubr.f32.gmra.mrb[0].mxu0 %v675
        %v758 = vpop.f32.mrb[0].mxu0
        %v759 = vadd.f32 %v662, %v758
        %v760 = vpop.f32.mrb[0].mxu0
        %761 = vdwg.mxu0
        %762 = vxpose.xlu0.b32.start [1/16] %v744, 128
        %763 = vxpose.xlu0.b32.cont [2/16] %v749, 128
        %764 = vxpose.xlu0.b32.cont [3/16] %v754, 128
        %765 = vxpose.xlu0.b32.cont [4/16] %v759, 128
        %766 = vxpose.xlu0.b32.cont [5/16] 0.0, 128
        %767 = vxpose.xlu0.b32.cont [6/16] 0.0, 128
        %768 = vxpose.xlu0.b32.cont [7/16] 0.0, 128
        %769 = vxpose.xlu0.b32.cont [8/16] 0.0, 128
        %770 = vxpose.xlu0.b32.cont [9/16] 0.0, 128
        %771 = vxpose.xlu0.b32.cont [10/16] 0.0, 128
        %772 = vxpose.xlu0.b32.cont [11/16] 0.0, 128
        %773 = vxpose.xlu0.b32.cont [12/16] 0.0, 128
        %774 = vxpose.xlu0.b32.cont [13/16] 0.0, 128
        %775 = vxpose.xlu0.b32.cont [14/16] 0.0, 128
        %776 = vxpose.xlu0.b32.cont [15/16] 0.0, 128
        %777 = vxpose.xlu0.b32.end [16/16] 0.0, 128
        %v778 = vpop.trf.xlu0
        %v779 = vpop.trf.xlu0
        %v780 = vpop.trf.xlu0
        %v781 = vpop.trf.xlu0
        %v782 = vpop.trf.xlu0
        %v783 = vpop.trf.xlu0
        %v784 = vpop.trf.xlu0
        %v785 = vpop.trf.xlu0
        %v786 = vpop.trf.xlu0
        %v787 = vpop.trf.xlu0
        %v788 = vpop.trf.xlu0
        %v789 = vpop.trf.xlu0
        %v790 = vpop.trf.xlu0
        %v791 = vpop.trf.xlu0
        %v792 = vpop.trf.xlu0
        %v793 = vpop.trf.xlu0
        %v794 = vadd.f32 %v442, %v778
        %v795 = vadd.f32 %v443, %v779
        %v796 = vld [vmem:[%s3] sm:$0x1]
        %v797 = vld [vmem:[%s4] sm:$0x1]
        %v798 = vsel %vm446, %v794, 0.0
        %799 = vadd.xlane.f32.xlu0 %v798
        %v800 = vpop.xlane.xlu0 %799
        %v801 = vsel %vm446, %v795, 0.0
        %802 = vadd.xlane.f32.xlu0 %v801
        %v803 = vpop.xlane.xlu0 %802
        %v804 = vmul.f32 %v800, %v453
        %v805 = vmul.f32 %v803, %v453
        %v806 = vsub.f32 %v794, %v804
        %v807 = vsub.f32 %v795, %v805
        %v808 = vmul.f32 %v806, %v806
        %v809 = vmul.f32 %v807, %v807
        %v810 = vsel %vm446, %v808, 0.0
        %811 = vadd.xlane.f32.xlu0 %v810
        %v812 = vpop.xlane.xlu0 %811
        %v813 = vsel %vm446, %v809, 0.0
        %814 = vadd.xlane.f32.xlu0 %v813
        %v815 = vpop.xlane.xlu0 %814
        %v816 = vmul.f32 %v812, %v453
        %v817 = vmul.f32 %v815, %v453
        %v818 = vadd.f32 %v816, 1e-05
        %v819 = vadd.f32 %v817, 1e-05
        %v820 = vrsqrt.pop %v818
        %v821 = vrsqrt.pop %v819
        %v822 = vmul.f32 %v806, %v820
        %v823 = vmul.f32 %v807, %v821
        %v825 = vlaneseq
        %v826 = vshrl.u32 %v825, 7
        %v827 = vsub.s32 0, %v826
        %v828 = vrot.slane %v796, %v827
        %v830 = vmul.f32 %v822, %v828
        %v831 = vmul.f32 %v823, %v828
        %v833 = vlaneseq
        %v834 = vshrl.u32 %v833, 7
        %v835 = vsub.s32 0, %v834
        %v836 = vrot.slane %v797, %v835
        %v838 = vadd.f32 %v830, %v836
        %v839 = vadd.f32 %v831, %v836
        %v840 = vld [vmem:[%s9] sm:$0xff]
        %v841 = vld [vmem:[%s9 + $0x8] sm:$0xff]
        %v842 = vld [vmem:[%s9 + $0x10] sm:$0xff]
        %v843 = vld [vmem:[%s9 + $0x18] sm:$0xff]
        %v844 = vld [vmem:[%s10] sm:$0x1]
        %v846 = vlaneseq
        %v847 = vshrl.u32 %v846, 7
        %v848 = vsub.s32 0, %v847
        %v849 = vrot.slane %v844, %v848
        %v852 = vsel %vm446, %v838, 0
        %v855 = vsel %vm446, %v839, 0
        %857 = vmatprep.subr.mxu0 0.0
        %858 = vmatpush1.msra.mxu0 %v840
        %859 = vmatprep.subr.mxu0 0.0
        %860 = vmatpush1.msra.mxu0 %v841
        %861 = vmatprep.subr.mxu0 0.0
        %862 = vmatpush1.msra.mxu0 %v842
        %863 = vmatprep.subr.mxu0 0.0
        %864 = vmatpush1.msra.mxu0 %v843
        %865 = vmatprep.subr.mxu0 0.0
        %866 = vmatpush1.msra.mxu0 0.0
        %867 = vmatprep.subr.mxu0 0.0
        %868 = vmatpush1.msra.mxu0 0.0
        %869 = vmatprep.subr.mxu0 0.0
        %870 = vmatpush1.msra.mxu0 0.0
        %871 = vmatprep.subr.mxu0 0.0
        %872 = vmatpush1.msra.mxu0 0.0
        %873 = vmatprep.subr.mxu0 0.0
        %874 = vmatpush1.msra.mxu0 0.0
        %875 = vmatprep.subr.mxu0 0.0
        %876 = vmatpush1.msra.mxu0 0.0
        %877 = vmatprep.subr.mxu0 0.0
        %878 = vmatpush1.msra.mxu0 0.0
        %879 = vmatprep.subr.mxu0 0.0
        %880 = vmatpush1.msra.mxu0 0.0
        %881 = vmatprep.subr.mxu0 0.0
        %882 = vmatpush1.msra.mxu0 0.0
        %883 = vmatprep.subr.mxu0 0.0
        %884 = vmatpush1.msra.mxu0 0.0
        %885 = vmatprep.subr.mxu0 0.0
        %886 = vmatpush1.msra.mxu0 0.0
        %887 = vmatprep.subr.mxu0 0.0
        %888 = vmatpush1.msra.mxu0 0.0
        %889 = vmatprep.subr.mxu0 0.0
        %890 = vmatpush1.msra.mxu0 0.0
        %891 = vmatprep.subr.mxu0 0.0
        %892 = vmatpush1.msra.mxu0 0.0
        %893 = vmatprep.subr.mxu0 0.0
        %894 = vmatpush1.msra.mxu0 0.0
        %895 = vmatprep.subr.mxu0 0.0
        %896 = vmatpush1.msra.mxu0 0.0
        %897 = vmatprep.subr.mxu0 0.0
        %898 = vmatpush1.msra.mxu0 0.0
        %899 = vmatprep.subr.mxu0 0.0
        %900 = vmatpush1.msra.mxu0 0.0
        %901 = vmatprep.subr.mxu0 0.0
        %902 = vmatpush1.msra.mxu0 0.0
        %903 = vmatprep.subr.mxu0 0.0
        %904 = vmatpush1.msra.mxu0 0.0
        %905 = vmatprep.subr.mxu0 0.0
        %906 = vmatpush1.msra.mxu0 0.0
        %907 = vmatprep.subr.mxu0 0.0
        %908 = vmatpush1.msra.mxu0 0.0
        %909 = vmatprep.subr.mxu0 0.0
        %910 = vmatpush1.msra.mxu0 0.0
        %911 = vmatprep.subr.mxu0 0.0
        %912 = vmatpush1.msra.mxu0 0.0
        %913 = vmatprep.subr.mxu0 0.0
        %914 = vmatpush1.msra.mxu0 0.0
        %915 = vmatprep.subr.mxu0 0.0
        %916 = vmatpush1.msra.mxu0 0.0
        %917 = vmatprep.subr.mxu0 0.0
        %918 = vmatpush1.msra.mxu0 0.0
        %919 = vmatprep.subr.mxu0 0.0
        %920 = vmatpush1.msra.mxu0 0.0
        %921 = vmatprep.mubr.f32.mxu0 0.0
        %922 = vmatmul.mubr.f32.gmra.mrb[0].mxu0 %v852
        %v923 = vpop.f32.mrb[0].mxu0
        %v924 = vadd.f32 %v849, %v923
        %v925 = vpop.f32.mrb[0].mxu0
        %926 = vmatprep.mubr.f32.mxu0 0.0
        %927 = vmatmul.mubr.f32.gmra.mrb[0].mxu0 %v855
        %v928 = vpop.f32.mrb[0].mxu0
        %v929 = vadd.f32 %v849, %v928
        %v930 = vpop.f32.mrb[0].mxu0
        %931 = vdwg.mxu0
        %v932 = vmul.f32 %v924, 0.5
        %v933 = vmul.f32 %v929, 0.5
        %v934 = vmul.f32 %v924, 0.70710677
        %v935 = vmul.f32 %v929, 0.70710677
        %v936 = verf.f32.pop %v934
        %v937 = verf.f32.pop %v935
        %v938 = vadd.f32 %v936, 1.0
        %v939 = vadd.f32 %v937, 1.0
        %v940 = vmul.f32 %v932, %v938
        %v941 = vmul.f32 %v933, %v939
        %v942 = vld [vmem:[%s11] sm:$0xff]
        %v943 = vld [vmem:[%s11 + $0x8] sm:$0xff]
        %v944 = vld [vmem:[%s11 + $0x10] sm:$0xff]
        %v945 = vld [vmem:[%s11 + $0x18] sm:$0xff]
        %v946 = vld [vmem:[%s11 + $0x20] sm:$0xff]
        %v947 = vld [vmem:[%s11 + $0x28] sm:$0xff]
        %v948 = vld [vmem:[%s11 + $0x30] sm:$0xff]
        %v949 = vld [vmem:[%s11 + $0x38] sm:$0xff]
        %v950 = vld [vmem:[%s12] sm:$0x1]
        %v952 = vlaneseq
        %v953 = vshrl.u32 %v952, 7
        %v954 = vsub.s32 0, %v953
        %v955 = vrot.slane %v950, %v954
        %v958 = vsel %vm664, %v940, 0
        %v961 = vsel %vm664, %v941, 0
        %963 = vmatprep.subr.mxu0 0.0
        %964 = vmatpush1.msra.mxu0 %v942
        %965 = vmatprep.subr.mxu0 0.0
        %966 = vmatpush1.msra.mxu0 %v943
        %967 = vmatprep.subr.mxu0 0.0
        %968 = vmatpush1.msra.mxu0 %v944
        %969 = vmatprep.subr.mxu0 0.0
        %970 = vmatpush1.msra.mxu0 %v945
        %971 = vmatprep.subr.mxu0 0.0
        %972 = vmatpush1.msra.mxu0 %v946
        %973 = vmatprep.subr.mxu0 0.0
        %974 = vmatpush1.msra.mxu0 %v947
        %975 = vmatprep.subr.mxu0 0.0
        %976 = vmatpush1.msra.mxu0 %v948
        %977 = vmatprep.subr.mxu0 0.0
        %978 = vmatpush1.msra.mxu0 %v949
        %979 = vmatprep.subr.mxu0 0.0
        %980 = vmatpush1.msra.mxu0 0.0
        %981 = vmatprep.subr.mxu0 0.0
        %982 = vmatpush1.msra.mxu0 0.0
        %983 = vmatprep.subr.mxu0 0.0
        %984 = vmatpush1.msra.mxu0 0.0
        %985 = vmatprep.subr.mxu0 0.0
        %986 = vmatpush1.msra.mxu0 0.0
        %987 = vmatprep.subr.mxu0 0.0
        %988 = vmatpush1.msra.mxu0 0.0
        %989 = vmatprep.subr.mxu0 0.0
        %990 = vmatpush1.msra.mxu0 0.0
        %991 = vmatprep.subr.mxu0 0.0
        %992 = vmatpush1.msra.mxu0 0.0
        %993 = vmatprep.subr.mxu0 0.0
        %994 = vmatpush1.msra.mxu0 0.0
        %995 = vmatprep.subr.mxu0 0.0
        %996 = vmatpush1.msra.mxu0 0.0
        %997 = vmatprep.subr.mxu0 0.0
        %998 = vmatpush1.msra.mxu0 0.0
        %999 = vmatprep.subr.mxu0 0.0
        %1000 = vmatpush1.msra.mxu0 0.0
        %1001 = vmatprep.subr.mxu0 0.0
        %1002 = vmatpush1.msra.mxu0 0.0
        %1003 = vmatprep.subr.mxu0 0.0
        %1004 = vmatpush1.msra.mxu0 0.0
        %1005 = vmatprep.subr.mxu0 0.0
        %1006 = vmatpush1.msra.mxu0 0.0
        %1007 = vmatprep.subr.mxu0 0.0
        %1008 = vmatpush1.msra.mxu0 0.0
        %1009 = vmatprep.subr.mxu0 0.0
        %1010 = vmatpush1.msra.mxu0 0.0
        %1011 = vmatprep.subr.mxu0 0.0
        %1012 = vmatpush1.msra.mxu0 0.0
        %1013 = vmatprep.subr.mxu0 0.0
        %1014 = vmatpush1.msra.mxu0 0.0
        %1015 = vmatprep.subr.mxu0 0.0
        %1016 = vmatpush1.msra.mxu0 0.0
        %1017 = vmatprep.subr.mxu0 0.0
        %1018 = vmatpush1.msra.mxu0 0.0
        %1019 = vmatprep.subr.mxu0 0.0
        %1020 = vmatpush1.msra.mxu0 0.0
        %1021 = vmatprep.subr.mxu0 0.0
        %1022 = vmatpush1.msra.mxu0 0.0
        %1023 = vmatprep.subr.mxu0 0.0
        %1024 = vmatpush1.msra.mxu0 0.0
        %1025 = vmatprep.subr.mxu0 0.0
        %1026 = vmatpush1.msra.mxu0 0.0
        %1027 = vmatprep.mubr.f32.mxu0 0.0
        %1028 = vmatmul.mubr.f32.gmra.mrb[0].mxu0 %v958
        %v1029 = vpop.f32.mrb[0].mxu0
        %v1030 = vadd.f32 %v955, %v1029
        %v1031 = vpop.f32.mrb[0].mxu0
        %1032 = vmatprep.mubr.f32.mxu0 0.0
        %1033 = vmatmul.mubr.f32.gmra.mrb[0].mxu0 %v961
        %v1034 = vpop.f32.mrb[0].mxu0
        %v1035 = vadd.f32 %v955, %v1034
        %v1036 = vpop.f32.mrb[0].mxu0
        %1037 = vdwg.mxu0
        %v1038 = vadd.f32 %v794, %v1030
        %v1039 = vadd.f32 %v795, %v1035
        %1040 = vst.msk [vmem:[%s434] sm:$0xff] %vm446, %v1038
        %1041 = vst.msk [vmem:[%s434 + $0x8] sm:$0xff] %vm446, %v1039
        %s1042 = sand.u32 %s313, 1
        %s1043 = scalar_lea.sflag [#allocation3], %s1042
        %s1044 = sand.u32 %s313, 1
        %s1045 = smul.addr %s1044, 16
        %s1046 = scalar_lea.vmem [#allocation2], %s1045
        // Predicated region
        $region73: #{mixer_layer.1} parent=71 // pred_check
          %p1047 = pneg %p323
        $region74: #{mixer_layer.1} parent=71 // pred_check_branch
          %1049 = sbr.rel (%p1047) target = $region76
        $region75: #{mixer_layer.1} parent=71 // pred_region
          %s1050 = smul.u32 2, %s27
          %s1052 = ssub.s32 256, 256
          %1053 = vsyncadd %s1043, %s1052
          %s1054 = smul.addr %s1050, 128
          %s1055 = scalar_lea.hbm %s13, %s1054
          %s1056 = sshll.u32 %s1046, 4
          %s1057 = int_to_ptr.vmem [resolvable:$true] %s1056
          %1062 = dma.vmem_to_hbm [thread:$0]  %s1057, 256, %s1055, %s1043, 128, 128, 8
        $region76: #{mixer_layer.1} parent=71 // pred_fallthru
          _
      $region72: #{mixer_layer.1} parent=5 // pred_fallthru
        _
      %p1063 = scmp.le.s32.totalorder 2, %s22
      // Predicated region
      $region77: #{mixer_layer.1} parent=5 // pred_check
        %p1064 = pneg %p1063
      $region78: #{mixer_layer.1} parent=5 // pred_check_branch
        %1066 = sbr.rel (%p1064) target = $region80
      $region79: #{mixer_layer.1} parent=5 // pred_region
        %s1067 = ssub.s32 %s22, 2
        // Predicated region
        $region81: #{mixer_layer.1} parent=79 // pred_check
          %p1068 = pneg %p329
        $region82: #{mixer_layer.1} parent=79 // pred_check_branch
          %1070 = sbr.rel (%p1068) target = $region84
        $region83: #{mixer_layer.1} parent=79 // pred_region
          %s1071 = sand.u32 %s314, 1
          %s1072 = scalar_lea.sflag [#allocation3], %s1071
          %s1073 = sand.u32 %s314, 1
          %s1074 = smul.addr %s1073, 16
          %s1075 = scalar_lea.vmem [#allocation2], %s1074
          %1076 = dma.done %s1072, 256
        $region84: #{mixer_layer.1} parent=79 // pred_fallthru
          _
      $region80: #{mixer_layer.1} parent=5 // pred_fallthru
        _
    $region6: #{mixer_layer.1} parent=1 // loop_footer
      %s26 = sadd.s32 1, %s22
    $region7: #{mixer_layer.1} parent=1 // loop_footer_branch
      %21 = sbr.rel target = $region3
    $region8: #{mixer_layer.1} parent=1 // loop_exit
      _
    %1077 = vsyncpa [#allocation3], 1
    %s1078 = scalar_lea.sflag [#allocation3], 1
    %1079 = vsyncpa %s1078, 1

</llo_original>
